<compile_context>
chip_gen: v5e
topology: v5e:2x2
jax: 0.10.0
libtpu: 0.0.40
codegen_flags: <defaults>
</compile_context>

<pallas_src>
import functools

import jax
import jax.numpy as jnp
import numpy as np
from jax.experimental import pallas as pl
from jax.experimental.pallas import tpu as pltpu


# ----------------------------------------------------------------------------
# Clamped band matrix (replicate padding folded in), built once per (L, k).
# ----------------------------------------------------------------------------
@functools.lru_cache(maxsize=None)
def _band_weights(L: int, kernel_size: int) -> np.ndarray:
    """W[i, j] = number of taps of the replicate-padded moving average at
    output step i that read source step j (integer counts, exact in bf16/f32).
    moving_mean = (1/kernel_size) * W @ x  for x of shape (L, C)."""
    pad = (kernel_size - 1) // 2
    i = np.arange(L, dtype=np.int64)[:, None]      # output position (rows)
    j = np.arange(L, dtype=np.int64)[None, :]      # source position (cols)
    interior = ((j >= i - pad) & (j <= i + pad) & (j > 0) & (j < L - 1)).astype(np.int64)
    left = (j == 0) * np.clip(pad - i + 1, 0, kernel_size)             # taps clamped to step 0
    right = (j == L - 1) * np.clip(i + pad - (L - 1) + 1, 0, kernel_size)  # clamped to step L-1
    return (interior + left + right).astype(np.float32)


# ----------------------------------------------------------------------------
# Kernel
# ----------------------------------------------------------------------------
def _make_kernel(inv_k: float, bt: int):
    def kernel(x_ref, w_ref, res_ref, mean_ref):
        # x_ref:    (bt, L, tc)   input tile in native (B, L, C) layout
        # w_ref:    (L, L)        clamped band tap counts (resident)
        # res_ref:  (bt, L, tc)
        # mean_ref: (bt, L, tc)
        w = w_ref[...]                         # hoisted: one read, reused across batch tile
        for b in range(bt):                    # static unroll, bt is small
            x = x_ref[b]                       # (L, tc)
            acc = jnp.dot(w, x, preferred_element_type=jnp.float32)   # MXU, f32 accumulate
            mean_f32 = acc * inv_k             # exact 1/k scale, single f32 VPU multiply
            mean = mean_f32.astype(mean_ref.dtype)
            mean_ref[b] = mean
            if x.dtype == jnp.bfloat16:
                res_ref[b] = x - mean          # native-dtype subtract (bf16 vregs)
            else:
                res_ref[b] = (x - mean_f32).astype(res_ref.dtype)
    return kernel


# ----------------------------------------------------------------------------
# Tiling helpers
# ----------------------------------------------------------------------------
def _choose_channel_tile(C: int, L: int, itemsize: int, budget: int) -> int:
    """Channel tile (lane axis).  Full-extent C is always layout-legal; larger
    C is split into 128-multiples that divide C so output stores stay dense."""
    if 6 * L * C * itemsize <= budget or C < 128:
        return C
    cands = [c for c in range(128, C + 1, 128)
             if C % c == 0 and 6 * L * c * itemsize <= budget]
    if cands:
        return max(cands)
    return C  # TODO(synk): pad C to a 128-multiple for huge non-factorable channel counts.


def _choose_batch_tile(B: int, x_bytes: int, buf_bytes: int, nct: int, budget: int) -> int:
    """Grow the batch tile when per-step slabs are tiny (amortize ~0.35us/step),
    keeping >= 2 grid steps for megacore sharding and capping the unroll."""
    bt = 1
    for cand in range(2, min(B, 8) + 1):
        if B % cand:
            continue
        if cand * x_bytes > (1 << 20):         # big enough already
            break
        if cand * buf_bytes > budget:
            break
        if (B // cand) * nct < 2 and B * nct >= 2:
            continue                           # don't collapse the parallel grid to 1 step
        bt = cand
    return bt


# ----------------------------------------------------------------------------
# Wrapper
# ----------------------------------------------------------------------------
def series_decomp(x, kernel_size: int):
    """x: (B, L, C). Returns (res, moving_mean), each (B, L, C)."""
    if kernel_size % 2 != 1:
        raise ValueError("series_decomp requires an odd kernel_size "
                         "(the PyTorch module mis-shapes for even sizes).")
    B, L, C = x.shape
    if L < 2:
        raise ValueError("sequence length must be >= 2")

    bf16_in = x.dtype == jnp.bfloat16
    w_dtype = jnp.bfloat16 if bf16_in else jnp.float32
    w = jnp.asarray(_band_weights(L, kernel_size), dtype=w_dtype)   # exact integer counts

    itemsize = jnp.dtype(x.dtype).itemsize
    w_bytes = L * L * jnp.dtype(w_dtype).itemsize

    # Generation-aware VMEM budget (v7x: 64 MiB, v5e/v6e: 128 MiB).
    try:
        cap = int(getattr(pltpu.get_tpu_info(), "vmem_capacity_bytes", 0))
    except Exception:
        cap = 0
    if not cap:
        cap = 64 * 1024 * 1024  # conservative fallback (v7x-sized)
    budget = max(int(0.7 * cap) - 2 * w_bytes, 4 * 1024 * 1024)

    # Channel tile (lane axis) and batch tile.
    tc = _choose_channel_tile(C, L, itemsize, budget)
    nct = C // tc
    bt = (_choose_batch_tile(B, L * tc * itemsize, 6 * L * tc * itemsize, nct, budget)
          if tc == C else 1)
    nbt = B // bt

    # W's block index never changes; single-buffer it once the second L*L
    # buffer would be real money in VMEM (large L).
    if 2 * w_bytes >= (4 << 20):
        a_spec = pl.BlockSpec((L, L), lambda b, c: (0, 0), pipeline_mode=pl.Buffered(1))
        a_buffers = 1
    else:
        a_spec = pl.BlockSpec((L, L), lambda b, c: (0, 0))
        a_buffers = 2

    blk = bt * L * tc * itemsize
    est = a_buffers * w_bytes + 2 * blk + 2 * 2 * blk     # x + two outputs, double-buffered
    vmem_limit = int(min(max(int(1.25 * est) + (4 << 20), 32 << 20), int(0.9 * cap)))

    kernel = _make_kernel(1.0 / float(kernel_size), bt)

    res, mean = pl.pallas_call(
        kernel,
        out_shape=(
            jax.ShapeDtypeStruct((B, L, C), x.dtype),   # res
            jax.ShapeDtypeStruct((B, L, C), x.dtype),   # moving_mean
        ),
        grid=(nbt, nct),
        in_specs=[
            pl.BlockSpec((bt, L, tc), lambda b, c: (b, 0, c)),
            a_spec,
        ],
        out_specs=(
            pl.BlockSpec((bt, L, tc), lambda b, c: (b, 0, c)),
            pl.BlockSpec((bt, L, tc), lambda b, c: (b, 0, c)),
        ),
        compiler_params=pltpu.CompilerParams(
            dimension_semantics=("parallel", "parallel"),
            vmem_limit_bytes=vmem_limit,
        ),
    )(x, w)
    return res, mean


# ----------------------------------------------------------------------------
# Pure-JAX reference (mirrors the PyTorch semantics) and self-test
# ----------------------------------------------------------------------------
def _reference(x, kernel_size):
    pad = (kernel_size - 1) // 2
    front = jnp.repeat(x[:, :1, :], pad, axis=1)
    end = jnp.repeat(x[:, -1:, :], pad, axis=1)
    xp = jnp.concatenate([front, x, end], axis=1)
    out_len = xp.shape[1] - kernel_size + 1
    windows = jnp.stack([xp[:, j:j + out_len, :] for j in range(kernel_size)], axis=0)
    mean = jnp.mean(windows, axis=0)
    return x - mean, mean


if __name__ == "__main__":
    key = jax.random.PRNGKey(0)

    # (B, L, C, kernel_size, dtype)
    configs = [
        (2, 128, 8, 25, jnp.float32),    # typical: L on MXU rows, small channel count
        (2, 96, 7, 13, jnp.float32),     # non-aligned L and C (full-extent block path)
        (2, 128, 16, 25, jnp.bfloat16),  # bf16 path: bf16 W, native-dtype residual
    ]
    for (B, L, C, ks, dtype) in configs:
        key, sub = jax.random.split(key)
        x = jax.random.normal(sub, (B, L, C), dtype=jnp.float32).astype(dtype)

        res, mean = series_decomp(x, ks)
        res = jax.block_until_ready(res)
        mean = jax.block_until_ready(mean)

        res_ref, mean_ref = _reference(x.astype(jnp.float32), ks)
        if dtype == jnp.bfloat16:
            atol = rtol = 5e-2   # bf16 storage of mean/res dominates the error
        else:
            atol = rtol = 1e-5
        assert jnp.allclose(mean.astype(jnp.float32), mean_ref, atol=atol, rtol=rtol), \
            ("mean mismatch", B, L, C, ks, dtype)
        assert jnp.allclose(res.astype(jnp.float32), res_ref, atol=atol, rtol=rtol), \
            ("res mismatch", B, L, C, ks, dtype)

    print("KERNEL_OK")
</pallas_src>

<mosaic_0001>
module attributes {stable_mosaic.version = 11 : i64} {
  func.func @kernel(%arg0: i32, %arg1: i32, %arg2: memref<1x128x8xf32, #tpu.memory_space<vmem>>, %arg3: memref<128x128xf32, #tpu.memory_space<vmem>>, %arg4: memref<1x128x8xf32, #tpu.memory_space<vmem>>, %arg5: memref<1x128x8xf32, #tpu.memory_space<vmem>>) attributes {dimension_semantics = [#tpu.dimension_semantics<parallel>, #tpu.dimension_semantics<parallel>], iteration_bounds = array<i64: 2, 1>, scalar_prefetch = 0 : i64, scratch_operands = 0 : i64, tpu.core_type = #tpu.core_type<tc>, window_params = [{transform_indices = @transform_0, window_bounds = array<i64: 1, 128, 8>}, {pipeline_mode = #tpu.pipeline_mode<synchronous>, transform_indices = @transform_1, window_bounds = array<i64: 128, 128>}, {transform_indices = @transform_2, window_bounds = array<i64: 1, 128, 8>}, {transform_indices = @transform_3, window_bounds = array<i64: 1, 128, 8>}]} {
    %c0 = arith.constant 0 : index
    %c0_0 = arith.constant 0 : index
    %0 = vector.load %arg3[%c0, %c0_0] : memref<128x128xf32, #tpu.memory_space<vmem>>, vector<128x128xf32>
    %c0_1 = arith.constant 0 : index
    %c0_2 = arith.constant 0 : index
    %c0_3 = arith.constant 0 : index
    %1 = vector.load %arg2[%c0_1, %c0_2, %c0_3] : memref<1x128x8xf32, #tpu.memory_space<vmem>>, vector<1x128x8xf32>
    %2 = vector.shape_cast %1 : vector<1x128x8xf32> to vector<128x8xf32>
    %cst = arith.constant dense<0.000000e+00> : vector<128x8xf32>
    %3 = tpu.matmul %0, %2, %cst {dimension_numbers = #tpu.dot_dimension_numbers<[1], [0], [0], [1], [0, 0, 1, 1], [], []>} : vector<128x128xf32>, vector<128x8xf32>, vector<128x8xf32> -> vector<128x8xf32>
    %cst_4 = arith.constant 4.000000e-02 : f32
    %4 = vector.broadcast %cst_4 : f32 to vector<128x8xf32>
    %5 = arith.mulf %3, %4 : vector<128x8xf32>
    %c0_5 = arith.constant 0 : index
    %c0_6 = arith.constant 0 : index
    %c0_7 = arith.constant 0 : index
    %6 = vector.load %arg5[%c0_5, %c0_6, %c0_7] : memref<1x128x8xf32, #tpu.memory_space<vmem>>, vector<1x128x8xf32>
    %7 = vector.shape_cast %6 : vector<1x128x8xf32> to vector<128x8xf32>
    %8 = vector.shape_cast %5 : vector<128x8xf32> to vector<1x128x8xf32>
    tpu.vector_store %arg5[%c0_5, %c0_6, %c0_7], %8 {strides = array<i32>} : memref<1x128x8xf32, #tpu.memory_space<vmem>>, vector<1x128x8xf32>,
    %9 = arith.subf %2, %5 : vector<128x8xf32>
    %c0_8 = arith.constant 0 : index
    %c0_9 = arith.constant 0 : index
    %c0_10 = arith.constant 0 : index
    %10 = vector.load %arg4[%c0_8, %c0_9, %c0_10] : memref<1x128x8xf32, #tpu.memory_space<vmem>>, vector<1x128x8xf32>
    %11 = vector.shape_cast %10 : vector<1x128x8xf32> to vector<128x8xf32>
    %12 = vector.shape_cast %9 : vector<128x8xf32> to vector<1x128x8xf32>
    tpu.vector_store %arg4[%c0_8, %c0_9, %c0_10], %12 {strides = array<i32>} : memref<1x128x8xf32, #tpu.memory_space<vmem>>, vector<1x128x8xf32>,
    return
  }
  func.func @transform_0(%arg0: i32, %arg1: i32) -> (i32, i32, i32) {
    %c0_i32 = arith.constant 0 : i32
    %c0_i32_0 = arith.constant 0 : i32
    return %arg0, %c0_i32, %arg1 : i32, i32, i32
  }
  func.func @transform_1(%arg0: i32, %arg1: i32) -> (i32, i32) {
    %c0_i32 = arith.constant 0 : i32
    %c0_i32_0 = arith.constant 0 : i32
    %c0_i32_1 = arith.constant 0 : i32
    return %c0_i32, %c0_i32_0 : i32, i32
  }
  func.func @transform_2(%arg0: i32, %arg1: i32) -> (i32, i32, i32) {
    %c0_i32 = arith.constant 0 : i32
    %c0_i32_0 = arith.constant 0 : i32
    return %arg0, %c0_i32, %arg1 : i32, i32, i32
  }
  func.func @transform_3(%arg0: i32, %arg1: i32) -> (i32, i32, i32) {
    %c0_i32 = arith.constant 0 : i32
    %c0_i32_0 = arith.constant 0 : i32
    return %arg0, %c0_i32, %arg1 : i32, i32, i32
  }
}

</mosaic_0001>

<llo_original>
// kernel: tpu_custom_call.1
$region0: #{tpu_custom_call.1}
  #allocation0 [shape = 'u32[]', space=smem, size = 0x4, offset = 0x4, fixed_abs, tag = 'smem constant byte address 0x4 - core index']
  #allocation1 [shape = 'u32[72,128]{1,0:T(1,128)}', space=vmem, size = 0x9000, scoped, tag = 'internal scratch']
  %s0 = inlined_call_operand.vmem [shape: f32[2,128,8], index: 0, kind: input, shape index: {}]
  %s1 = inlined_call_operand.vmem [shape: f32[128,128], index: 1, kind: input, shape index: {}]
  %s2 = inlined_call_operand.vmem [shape: f32[2,128,8], index: 2, kind: output, shape index: {0}]
  %s3 = inlined_call_operand.vmem [shape: f32[2,128,8], index: 3, kind: output, shape index: {1}]
  %4 = xla_tuple %s2, %s3
  %s5 = sld [smem:[#allocation0]]
  $region49: #{tpu_custom_call.1} parent=0
    _
  %s7 = ssub.s32 1, %s5
  %s8 = scalar_select 0, %s7, %s5
  loop: start=0, step=1, limit=4
  $region2: #{tpu_custom_call.1} parent=0 // loop_pre_header
    _
  $region3: #{tpu_custom_call.1} parent=0 // loop_header
    %s10 = sphi 0, %s14
    %p11 = scmp.ge.s32.totalorder %s10, 4
    %s17 = sphi 0, %s29
    %s18 = sphi 0, %s25
    %s19 = sphi 0, %s17
    %s20 = sphi 0, %s18
    %s21 = sphi 0, %s19
    %s22 = sphi 0, %s20
    %s34 = sphi 0, %s36
    %s37 = sphi 0, %s34
    %s38 = sphi 0, %s37
    %s54 = sphi 0, %s38
    %s58 = sphi 0, %s58
    %s60 = sphi 0, %s58
    %s61 = sphi 0, %s60
    %s75 = sphi 0, %s61
    %s83 = sphi 0, %s85
    %s86 = sphi 0, %s83
    %s87 = sphi 0, %s86
    %s103 = sphi 0, %s87
    %s111 = sphi 0, %s113
    %s114 = sphi 0, %s111
    %s115 = sphi 0, %s114
    %s131 = sphi 0, %s115
  $region4: #{tpu_custom_call.1} parent=0 // loop_header_branch
    %13 = sbr.rel (%p11) target = $region8
  $region5: #{tpu_custom_call.1} parent=0 // loop_body
    %s15 = ssub.s32 %s10, 1
    %s16 = ssub.s32 %s10, 2
    %s23 = sadd.s32 1, %s18
    %p24 = scmp.ge.s32.totalorder %s23, 1
    %s25 = scalar_select %p24, 0, %s23
    %s26 = sadd.s32 1, %s17
    %s27 = scalar_select %p24, %s26, %s17
    %p28 = scmp.ge.s32.totalorder %s27, 2
    %s29 = scalar_select %p28, 0, %s27
    %s30 = ssub.s32 %s17, %s29
    %s31 = ssub.s32 %s18, %s25
    %s32 = sor.u32 %s30, %s31
    %p33 = scmp.eq.s32.totalorder %s32, 0
    %s35 = sadd.s32 %s34, 1
    %s36 = scalar_select %p33, %s34, %s35
    %p39 = pneg %p33
    %p40 = scmp.eq.s32.totalorder %s10, 1
    %p41 = por %p39, %p40
    %p42 = scmp.ne.s32.totalorder %s34, %s37
    %p43 = scmp.eq.s32.totalorder %s10, 0
    %p44 = por %p42, %p43
    %p45 = scmp.ne.s32.totalorder %s34, %s37
    %p46 = scmp.eq.s32.totalorder %s15, 1
    %p47 = por %p45, %p46
    %p48 = scmp.ne.s32.totalorder %s37, %s38
    %p49 = scmp.eq.s32.totalorder %s15, 0
    %p50 = por %p48, %p49
    %p51 = scmp.ne.s32.totalorder %s37, %s38
    %p52 = scmp.eq.s32.totalorder %s16, 1
    %p53 = por %p51, %p52
    %p55 = scmp.ne.s32.totalorder %s38, %s54
    %p56 = scmp.eq.s32.totalorder %s16, 0
    %p57 = por %p55, %p56
    %s59 = sadd.s32 %s58, 1
    %p62 = scmp.eq.s32.totalorder %s10, 1
    %p63 = scmp.ne.s32.totalorder %s58, %s60
    %p64 = scmp.eq.s32.totalorder %s10, 0
    %p65 = por %p63, %p64
    %p66 = scmp.ne.s32.totalorder %s58, %s60
    %p67 = scmp.eq.s32.totalorder %s15, 1
    %p68 = por %p66, %p67
    %p69 = scmp.ne.s32.totalorder %s60, %s61
    %p70 = scmp.eq.s32.totalorder %s15, 0
    %p71 = por %p69, %p70
    %p72 = scmp.ne.s32.totalorder %s60, %s61
    %p73 = scmp.eq.s32.totalorder %s16, 1
    %p74 = por %p72, %p73
    %p76 = scmp.ne.s32.totalorder %s61, %s75
    %p77 = scmp.eq.s32.totalorder %s16, 0
    %p78 = por %p76, %p77
    %s79 = ssub.s32 %s17, %s29
    %s80 = ssub.s32 %s18, %s25
    %s81 = sor.u32 %s79, %s80
    %p82 = scmp.eq.s32.totalorder %s81, 0
    %s84 = sadd.s32 %s83, 1
    %s85 = scalar_select %p82, %s83, %s84
    %p88 = pneg %p82
    %p89 = scmp.eq.s32.totalorder %s10, 1
    %p90 = por %p88, %p89
    %p91 = scmp.ne.s32.totalorder %s83, %s86
    %p92 = scmp.eq.s32.totalorder %s10, 0
    %p93 = por %p91, %p92
    %p94 = scmp.ne.s32.totalorder %s83, %s86
    %p95 = scmp.eq.s32.totalorder %s15, 1
    %p96 = por %p94, %p95
    %p97 = scmp.ne.s32.totalorder %s86, %s87
    %p98 = scmp.eq.s32.totalorder %s15, 0
    %p99 = por %p97, %p98
    %p100 = scmp.ne.s32.totalorder %s86, %s87
    %p101 = scmp.eq.s32.totalorder %s16, 1
    %p102 = por %p100, %p101
    %p104 = scmp.ne.s32.totalorder %s87, %s103
    %p105 = scmp.eq.s32.totalorder %s16, 0
    %p106 = por %p104, %p105
    %s107 = ssub.s32 %s17, %s29
    %s108 = ssub.s32 %s18, %s25
    %s109 = sor.u32 %s107, %s108
    %p110 = scmp.eq.s32.totalorder %s109, 0
    %s112 = sadd.s32 %s111, 1
    %s113 = scalar_select %p110, %s111, %s112
    %p116 = pneg %p110
    %p117 = scmp.eq.s32.totalorder %s10, 1
    %p118 = por %p116, %p117
    %p119 = scmp.ne.s32.totalorder %s111, %s114
    %p120 = scmp.eq.s32.totalorder %s10, 0
    %p121 = por %p119, %p120
    %p122 = scmp.ne.s32.totalorder %s111, %s114
    %p123 = scmp.eq.s32.totalorder %s15, 1
    %p124 = por %p122, %p123
    %p125 = scmp.ne.s32.totalorder %s114, %s115
    %p126 = scmp.eq.s32.totalorder %s15, 0
    %p127 = por %p125, %p126
    %p128 = scmp.ne.s32.totalorder %s114, %s115
    %p129 = scmp.eq.s32.totalorder %s16, 1
    %p130 = por %p128, %p129
    %p132 = scmp.ne.s32.totalorder %s115, %s131
    %p133 = scmp.eq.s32.totalorder %s16, 0
    %p134 = por %p132, %p133
    %p135 = scmp.le.s32.totalorder 1, %s10
    %p136 = scmp.lt.s32.totalorder %s10, 3
    %p137 = pnand %p135, %p136
    %p138 = pneg %p137
    // Predicated region
    $region9: #{tpu_custom_call.1} parent=5 // pred_check
      _
    $region10: #{tpu_custom_call.1} parent=5 // pred_check_branch
      %140 = sbr.rel (%p137) target = $region12
    $region11: #{tpu_custom_call.1} parent=5 // pred_region
      %s141 = ssub.s32 %s10, 1
      // Predicated region
      $region13: #{tpu_custom_call.1} parent=11 // pred_check
        %p142 = pneg %p71
      $region14: #{tpu_custom_call.1} parent=11 // pred_check_branch
        %144 = sbr.rel (%p142) target = $region16
      $region15: #{tpu_custom_call.1} parent=11 // pred_region
        _
      $region16: #{tpu_custom_call.1} parent=11 // pred_fallthru
        _
    $region12: #{tpu_custom_call.1} parent=5 // pred_fallthru
      _
    %p145 = scmp.lt.s32.totalorder %s10, 2
    // Predicated region
    $region17: #{tpu_custom_call.1} parent=5 // pred_check
      %p146 = pneg %p145
    $region18: #{tpu_custom_call.1} parent=5 // pred_check_branch
      %148 = sbr.rel (%p146) target = $region20
    $region19: #{tpu_custom_call.1} parent=5 // pred_region
      // Predicated region
      $region21: #{tpu_custom_call.1} parent=19 // pred_check
        %p149 = pneg %p44
      $region22: #{tpu_custom_call.1} parent=19 // pred_check_branch
        %151 = sbr.rel (%p149) target = $region24
      $region23: #{tpu_custom_call.1} parent=19 // pred_region
        %p152 = scmp.lt.s32.totalorder %s17, 1
        %s153 = scalar_select %p152, %s17, 1
        %p154 = scmp.lt.s32.totalorder %s18, 0
        %s155 = scalar_select %p154, %s18, 0
        %s156 = smul.addr %s153, 16
        %s157 = sadd.s32 %s155, %s156
        %s158 = smul.addr %s157, 8
        %s159 = scalar_lea.vmem %s0, %s158
      $region24: #{tpu_custom_call.1} parent=19 // pred_fallthru
        _
    $region20: #{tpu_custom_call.1} parent=5 // pred_fallthru
      _
    %p160 = scmp.le.s32.totalorder 1, %s10
    %p161 = scmp.lt.s32.totalorder %s10, 3
    %p162 = pnand %p160, %p161
    %p163 = pneg %p162
    // Predicated region
    $region25: #{tpu_custom_call.1} parent=5 // pred_check
      _
    $region26: #{tpu_custom_call.1} parent=5 // pred_check_branch
      %165 = sbr.rel (%p162) target = $region28
    $region27: #{tpu_custom_call.1} parent=5 // pred_region
      %s166 = ssub.s32 %s10, 1
      %p167 = scmp.lt.s32.totalorder %s19, 1
      %s168 = scalar_select %p167, %s19, 1
      %p169 = scmp.lt.s32.totalorder %s20, 0
      %s170 = scalar_select %p169, %s20, 0
      %s171 = smul.addr %s168, 16
      %s172 = sadd.s32 %s170, %s171
      %s173 = smul.addr %s172, 8
      %s174 = scalar_lea.vmem %s0, %s173
      %p175 = pneg %p50
      %p176 = pneg %p47
      %p177 = pneg %p71
      %p178 = pneg %p68
      %p179 = pneg %p99
      %p180 = pneg %p96
      %p181 = scmp.lt.s32.totalorder %s19, 1
      %s182 = scalar_select %p181, %s19, 1
      %p183 = scmp.lt.s32.totalorder %s20, 0
      %s184 = scalar_select %p183, %s20, 0
      %s185 = smul.addr %s182, 16
      %s186 = sadd.s32 %s184, %s185
      %s187 = smul.addr %s186, 8
      %s188 = scalar_lea.vmem %s2, %s187
      %p189 = pneg %p127
      %p190 = pneg %p124
      %p191 = scmp.lt.s32.totalorder %s19, 1
      %s192 = scalar_select %p191, %s19, 1
      %p193 = scmp.lt.s32.totalorder %s20, 0
      %s194 = scalar_select %p193, %s20, 0
      %s195 = smul.addr %s192, 16
      %s196 = sadd.s32 %s194, %s195
      %s197 = smul.addr %s196, 8
      %s198 = scalar_lea.vmem %s3, %s197
      %p199 = scmp.lt.s32.totalorder %s19, 1
      %s200 = scalar_select %p199, %s19, 1
      %p201 = scmp.lt.s32.totalorder %s20, 0
      %s202 = scalar_select %p201, %s20, 0
      %s203 = smul.addr %s200, 16
      %s204 = sadd.s32 %s202, %s203
      %s205 = smul.addr %s204, 8
      %s206 = scalar_lea.vmem %s0, %s205
      %p207 = scmp.lt.s32.totalorder %s19, 1
      %s208 = scalar_select %p207, %s19, 1
      %p209 = scmp.lt.s32.totalorder %s20, 0
      %s210 = scalar_select %p209, %s20, 0
      %s211 = smul.addr %s208, 16
      %s212 = sadd.s32 %s210, %s211
      %s213 = smul.addr %s212, 8
      %s214 = scalar_lea.vmem %s2, %s213
      %p215 = scmp.lt.s32.totalorder %s19, 1
      %s216 = scalar_select %p215, %s19, 1
      %p217 = scmp.lt.s32.totalorder %s20, 0
      %s218 = scalar_select %p217, %s20, 0
      %s219 = smul.addr %s216, 16
      %s220 = sadd.s32 %s218, %s219
      %s221 = smul.addr %s220, 8
      %s222 = scalar_lea.vmem %s3, %s221
      %v223 = vld [vmem:[%s1] sm:$0xff]
      %v224 = vld [vmem:[%s1 + $0x8] sm:$0xff]
      %v225 = vld [vmem:[%s1 + $0x10] sm:$0xff]
      %v226 = vld [vmem:[%s1 + $0x18] sm:$0xff]
      %v227 = vld [vmem:[%s1 + $0x20] sm:$0xff]
      %v228 = vld [vmem:[%s1 + $0x28] sm:$0xff]
      %v229 = vld [vmem:[%s1 + $0x30] sm:$0xff]
      %v230 = vld [vmem:[%s1 + $0x38] sm:$0xff]
      %v231 = vld [vmem:[%s1 + $0x40] sm:$0xff]
      %v232 = vld [vmem:[%s1 + $0x48] sm:$0xff]
      %v233 = vld [vmem:[%s1 + $0x50] sm:$0xff]
      %v234 = vld [vmem:[%s1 + $0x58] sm:$0xff]
      %v235 = vld [vmem:[%s1 + $0x60] sm:$0xff]
      %v236 = vld [vmem:[%s1 + $0x68] sm:$0xff]
      %v237 = vld [vmem:[%s1 + $0x70] sm:$0xff]
      %v238 = vld [vmem:[%s1 + $0x78] sm:$0xff]
      %v239 = vld [vmem:[%s206] sm:$0xff]
      %v240 = vld [vmem:[%s206 + $0x8] sm:$0xff]
      %v241 = vld [vmem:[%s206 + $0x10] sm:$0xff]
      %v242 = vld [vmem:[%s206 + $0x18] sm:$0xff]
      %v243 = vld [vmem:[%s206 + $0x20] sm:$0xff]
      %v244 = vld [vmem:[%s206 + $0x28] sm:$0xff]
      %v245 = vld [vmem:[%s206 + $0x30] sm:$0xff]
      %v246 = vld [vmem:[%s206 + $0x38] sm:$0xff]
      %v247 = vld [vmem:[%s206 + $0x40] sm:$0xff]
      %v248 = vld [vmem:[%s206 + $0x48] sm:$0xff]
      %v249 = vld [vmem:[%s206 + $0x50] sm:$0xff]
      %v250 = vld [vmem:[%s206 + $0x58] sm:$0xff]
      %v251 = vld [vmem:[%s206 + $0x60] sm:$0xff]
      %v252 = vld [vmem:[%s206 + $0x68] sm:$0xff]
      %v253 = vld [vmem:[%s206 + $0x70] sm:$0xff]
      %v254 = vld [vmem:[%s206 + $0x78] sm:$0xff]
      %255 = vmatpush.msra.mxu0 %v254
      %256 = vmatpush.msra.mxu0 %v253
      %257 = vmatpush.msra.mxu0 %v252
      %258 = vmatpush.msra.mxu0 %v251
      %259 = vmatpush.msra.mxu0 %v250
      %260 = vmatpush.msra.mxu0 %v249
      %261 = vmatpush.msra.mxu0 %v248
      %262 = vmatpush.msra.mxu0 %v247
      %263 = vmatpush.msra.mxu0 %v246
      %264 = vmatpush.msra.mxu0 %v245
      %265 = vmatpush.msra.mxu0 %v244
      %266 = vmatpush.msra.mxu0 %v243
      %267 = vmatpush.msra.mxu0 %v242
      %268 = vmatpush.msra.mxu0 %v241
      %269 = vmatpush.msra.mxu0 %v240
      %270 = vmatpush.msra.mxu0 %v239
      %271 = vmatmul.f32.gmra.mxu0 %v223
      %v272 = vpop.f32.mrf.mxu0
      %v273 = vadd.f32 0.0, %v272
      %274 = vmatmul.f32.gmra.mxu0 %v224
      %v275 = vpop.f32.mrf.mxu0
      %v276 = vadd.f32 0.0, %v275
      %277 = vmatmul.f32.gmra.mxu0 %v225
      %v278 = vpop.f32.mrf.mxu0
      %v279 = vadd.f32 0.0, %v278
      %280 = vmatmul.f32.gmra.mxu0 %v226
      %v281 = vpop.f32.mrf.mxu0
      %v282 = vadd.f32 0.0, %v281
      %283 = vmatmul.f32.gmra.mxu0 %v227
      %v284 = vpop.f32.mrf.mxu0
      %v285 = vadd.f32 0.0, %v284
      %286 = vmatmul.f32.gmra.mxu0 %v228
      %v287 = vpop.f32.mrf.mxu0
      %v288 = vadd.f32 0.0, %v287
      %289 = vmatmul.f32.gmra.mxu0 %v229
      %v290 = vpop.f32.mrf.mxu0
      %v291 = vadd.f32 0.0, %v290
      %292 = vmatmul.f32.gmra.mxu0 %v230
      %v293 = vpop.f32.mrf.mxu0
      %v294 = vadd.f32 0.0, %v293
      %295 = vmatmul.f32.gmra.mxu0 %v231
      %v296 = vpop.f32.mrf.mxu0
      %v297 = vadd.f32 0.0, %v296
      %298 = vmatmul.f32.gmra.mxu0 %v232
      %v299 = vpop.f32.mrf.mxu0
      %v300 = vadd.f32 0.0, %v299
      %301 = vmatmul.f32.gmra.mxu0 %v233
      %v302 = vpop.f32.mrf.mxu0
      %v303 = vadd.f32 0.0, %v302
      %304 = vmatmul.f32.gmra.mxu0 %v234
      %v305 = vpop.f32.mrf.mxu0
      %v306 = vadd.f32 0.0, %v305
      %307 = vmatmul.f32.gmra.mxu0 %v235
      %v308 = vpop.f32.mrf.mxu0
      %v309 = vadd.f32 0.0, %v308
      %310 = vmatmul.f32.gmra.mxu0 %v236
      %v311 = vpop.f32.mrf.mxu0
      %v312 = vadd.f32 0.0, %v311
      %313 = vmatmul.f32.gmra.mxu0 %v237
      %v314 = vpop.f32.mrf.mxu0
      %v315 = vadd.f32 0.0, %v314
      %316 = vmatmul.f32.gmra.mxu0 %v238
      %v317 = vpop.f32.mrf.mxu0
      %v318 = vadd.f32 0.0, %v317
      %319 = vdwg.mxu0
      %v320 = vmul.f32 %v273, 0.04
      %v321 = vmul.f32 %v276, 0.04
      %v322 = vmul.f32 %v279, 0.04
      %v323 = vmul.f32 %v282, 0.04
      %v324 = vmul.f32 %v285, 0.04
      %v325 = vmul.f32 %v288, 0.04
      %v326 = vmul.f32 %v291, 0.04
      %v327 = vmul.f32 %v294, 0.04
      %v328 = vmul.f32 %v297, 0.04
      %v329 = vmul.f32 %v300, 0.04
      %v330 = vmul.f32 %v303, 0.04
      %v331 = vmul.f32 %v306, 0.04
      %v332 = vmul.f32 %v309, 0.04
      %v333 = vmul.f32 %v312, 0.04
      %v334 = vmul.f32 %v315, 0.04
      %v335 = vmul.f32 %v318, 0.04
      %vm336 = vcmask 64512
      %337 = vst.msk [vmem:[%s222] sm:$0xff] %vm336, %v320
      %338 = vst.msk [vmem:[%s222 + $0x8] sm:$0xff] %vm336, %v321
      %339 = vst.msk [vmem:[%s222 + $0x10] sm:$0xff] %vm336, %v322
      %340 = vst.msk [vmem:[%s222 + $0x18] sm:$0xff] %vm336, %v323
      %341 = vst.msk [vmem:[%s222 + $0x20] sm:$0xff] %vm336, %v324
      %342 = vst.msk [vmem:[%s222 + $0x28] sm:$0xff] %vm336, %v325
      %343 = vst.msk [vmem:[%s222 + $0x30] sm:$0xff] %vm336, %v326
      %344 = vst.msk [vmem:[%s222 + $0x38] sm:$0xff] %vm336, %v327
      %345 = vst.msk [vmem:[%s222 + $0x40] sm:$0xff] %vm336, %v328
      %346 = vst.msk [vmem:[%s222 + $0x48] sm:$0xff] %vm336, %v329
      %347 = vst.msk [vmem:[%s222 + $0x50] sm:$0xff] %vm336, %v330
      %348 = vst.msk [vmem:[%s222 + $0x58] sm:$0xff] %vm336, %v331
      %349 = vst.msk [vmem:[%s222 + $0x60] sm:$0xff] %vm336, %v332
      %350 = vst.msk [vmem:[%s222 + $0x68] sm:$0xff] %vm336, %v333
      %351 = vst.msk [vmem:[%s222 + $0x70] sm:$0xff] %vm336, %v334
      %352 = vst.msk [vmem:[%s222 + $0x78] sm:$0xff] %vm336, %v335
      %v353 = vsub.f32 %v239, %v320
      %v354 = vsub.f32 %v240, %v321
      %v355 = vsub.f32 %v241, %v322
      %v356 = vsub.f32 %v242, %v323
      %v357 = vsub.f32 %v243, %v324
      %v358 = vsub.f32 %v244, %v325
      %v359 = vsub.f32 %v245, %v326
      %v360 = vsub.f32 %v246, %v327
      %v361 = vsub.f32 %v247, %v328
      %v362 = vsub.f32 %v248, %v329
      %v363 = vsub.f32 %v249, %v330
      %v364 = vsub.f32 %v250, %v331
      %v365 = vsub.f32 %v251, %v332
      %v366 = vsub.f32 %v252, %v333
      %v367 = vsub.f32 %v253, %v334
      %v368 = vsub.f32 %v254, %v335
      %369 = vst.msk [vmem:[%s214] sm:$0xff] %vm336, %v353
      %370 = vst.msk [vmem:[%s214 + $0x8] sm:$0xff] %vm336, %v354
      %371 = vst.msk [vmem:[%s214 + $0x10] sm:$0xff] %vm336, %v355
      %372 = vst.msk [vmem:[%s214 + $0x18] sm:$0xff] %vm336, %v356
      %373 = vst.msk [vmem:[%s214 + $0x20] sm:$0xff] %vm336, %v357
      %374 = vst.msk [vmem:[%s214 + $0x28] sm:$0xff] %vm336, %v358
      %375 = vst.msk [vmem:[%s214 + $0x30] sm:$0xff] %vm336, %v359
      %376 = vst.msk [vmem:[%s214 + $0x38] sm:$0xff] %vm336, %v360
      %377 = vst.msk [vmem:[%s214 + $0x40] sm:$0xff] %vm336, %v361
      %378 = vst.msk [vmem:[%s214 + $0x48] sm:$0xff] %vm336, %v362
      %379 = vst.msk [vmem:[%s214 + $0x50] sm:$0xff] %vm336, %v363
      %380 = vst.msk [vmem:[%s214 + $0x58] sm:$0xff] %vm336, %v364
      %381 = vst.msk [vmem:[%s214 + $0x60] sm:$0xff] %vm336, %v365
      %382 = vst.msk [vmem:[%s214 + $0x68] sm:$0xff] %vm336, %v366
      %383 = vst.msk [vmem:[%s214 + $0x70] sm:$0xff] %vm336, %v367
      %384 = vst.msk [vmem:[%s214 + $0x78] sm:$0xff] %vm336, %v368
      %p385 = scmp.lt.s32.totalorder %s19, 1
      %s386 = scalar_select %p385, %s19, 1
      %p387 = scmp.lt.s32.totalorder %s20, 0
      %s388 = scalar_select %p387, %s20, 0
      %s389 = smul.addr %s386, 16
      %s390 = sadd.s32 %s388, %s389
      %s391 = smul.addr %s390, 8
      %s392 = scalar_lea.vmem %s2, %s391
      %p393 = scmp.lt.s32.totalorder %s19, 1
      %s394 = scalar_select %p393, %s19, 1
      %p395 = scmp.lt.s32.totalorder %s20, 0
      %s396 = scalar_select %p395, %s20, 0
      %s397 = smul.addr %s394, 16
      %s398 = sadd.s32 %s396, %s397
      %s399 = smul.addr %s398, 8
      %s400 = scalar_lea.vmem %s3, %s399
      // Predicated region
      $region29: #{tpu_custom_call.1} parent=27 // pred_check
        %p401 = pneg %p96
      $region30: #{tpu_custom_call.1} parent=27 // pred_check_branch
        %403 = sbr.rel (%p401) target = $region32
      $region31: #{tpu_custom_call.1} parent=27 // pred_region
        _
      $region32: #{tpu_custom_call.1} parent=27 // pred_fallthru
        _
      // Predicated region
      $region33: #{tpu_custom_call.1} parent=27 // pred_check
        %p404 = pneg %p124
      $region34: #{tpu_custom_call.1} parent=27 // pred_check_branch
        %406 = sbr.rel (%p404) target = $region36
      $region35: #{tpu_custom_call.1} parent=27 // pred_region
        _
      $region36: #{tpu_custom_call.1} parent=27 // pred_fallthru
        _
    $region28: #{tpu_custom_call.1} parent=5 // pred_fallthru
      _
    %p407 = scmp.le.s32.totalorder 2, %s10
    // Predicated region
    $region37: #{tpu_custom_call.1} parent=5 // pred_check
      %p408 = pneg %p407
    $region38: #{tpu_custom_call.1} parent=5 // pred_check_branch
      %410 = sbr.rel (%p408) target = $region40
    $region39: #{tpu_custom_call.1} parent=5 // pred_region
      %s411 = ssub.s32 %s10, 2
      // Predicated region
      $region41: #{tpu_custom_call.1} parent=39 // pred_check
        %p412 = pneg %p102
      $region42: #{tpu_custom_call.1} parent=39 // pred_check_branch
        %414 = sbr.rel (%p412) target = $region44
      $region43: #{tpu_custom_call.1} parent=39 // pred_region
        %p415 = scmp.lt.s32.totalorder %s21, 1
        %s416 = scalar_select %p415, %s21, 1
        %p417 = scmp.lt.s32.totalorder %s22, 0
        %s418 = scalar_select %p417, %s22, 0
        %s419 = smul.addr %s416, 16
        %s420 = sadd.s32 %s418, %s419
        %s421 = smul.addr %s420, 8
        %s422 = scalar_lea.vmem %s2, %s421
      $region44: #{tpu_custom_call.1} parent=39 // pred_fallthru
        _
      // Predicated region
      $region45: #{tpu_custom_call.1} parent=39 // pred_check
        %p423 = pneg %p130
      $region46: #{tpu_custom_call.1} parent=39 // pred_check_branch
        %425 = sbr.rel (%p423) target = $region48
      $region47: #{tpu_custom_call.1} parent=39 // pred_region
        %p426 = scmp.lt.s32.totalorder %s21, 1
        %s427 = scalar_select %p426, %s21, 1
        %p428 = scmp.lt.s32.totalorder %s22, 0
        %s429 = scalar_select %p428, %s22, 0
        %s430 = smul.addr %s427, 16
        %s431 = sadd.s32 %s429, %s430
        %s432 = smul.addr %s431, 8
        %s433 = scalar_lea.vmem %s3, %s432
      $region48: #{tpu_custom_call.1} parent=39 // pred_fallthru
        _
    $region40: #{tpu_custom_call.1} parent=5 // pred_fallthru
      _
  $region6: #{tpu_custom_call.1} parent=0 // loop_footer
    %s14 = sadd.s32 1, %s10
  $region7: #{tpu_custom_call.1} parent=0 // loop_footer_branch
    %9 = sbr.rel target = $region3
  $region8: #{tpu_custom_call.1} parent=0 // loop_exit
    _

</llo_original>
